<compile_context>
chip_gen: v6e
topology: v6e:2x2x1
jax: 0.10.0
libtpu: 0.0.40
codegen_flags: <defaults>
</compile_context>

<pallas_src>
import jax
import jax.numpy as jnp
import numpy as np
from jax.experimental import pallas as pl
from jax.experimental.pallas import tpu as pltpu


def _round_up(x, m):
    return ((x + m - 1) // m) * m


def affine_coupling_kernel(x0_ref, x1_ref, ws_ref, wl_ref, bs_ref, bl_ref,
                           y1_ref, ls_ref):
    """One (TM, lane-packed) row tile of the coupling transform.

    shift     = x0 @ Ws + bs       (MXU, f32 accumulation)
    log_scale = x0 @ Wl + bl       (MXU, f32 accumulation)
    y1        = x1 * exp(log_scale) + shift   (VPU + EUP)
    """
    x0 = x0_ref[...]
    shift = jnp.dot(x0, ws_ref[...], preferred_element_type=jnp.float32) + bs_ref[...]
    log_scale = jnp.dot(x0, wl_ref[...], preferred_element_type=jnp.float32) + bl_ref[...]
    y1 = x1_ref[...].astype(jnp.float32) * jnp.exp(log_scale) + shift
    y1_ref[...] = y1.astype(y1_ref.dtype)
    ls_ref[...] = log_scale.astype(ls_ref.dtype)


def affine_coupling_forward(x, mask, w_shift, b_shift, w_log_scale, b_log_scale):
    """Pallas equivalent of AffineCoupling.forward(x, cond=None).

    Args:
      x:           (M, D) input, features along dim 1.
      mask:        (D,) boolean numpy mask selecting the "identity" half x0.
      w_shift:     (D0, D1) conditioner weight for shift.
      b_shift:     (D1,)    conditioner bias   for shift.
      w_log_scale: (D0, D1) conditioner weight for log_scale.
      b_log_scale: (D1,)    conditioner bias   for log_scale.
    Returns:
      (y, log_scale): y = concat([x0, x1 * exp(log_scale) + shift], axis=1)
      of shape (M, D); log_scale of shape (M, D1).
    """
    mask = np.asarray(mask, dtype=bool)
    idx0 = np.flatnonzero(mask)
    idx1 = np.flatnonzero(~mask)
    D0, D1 = int(idx0.size), int(idx1.size)

    dtype = x.dtype
    itemsize = jnp.dtype(dtype).itemsize
    x0 = jnp.take(x, jnp.asarray(idx0), axis=1)
    x1 = jnp.take(x, jnp.asarray(idx1), axis=1)
    M = x0.shape[0]

    # Lane-densify: pack P logical rows per physical row so the output last dim
    # is >= 128 lanes; the matmul uses a block-diagonal weight (P copies of W),
    # which is bit-identical to the unpacked per-row matmul.
    P = max(1, -(-128 // D1))
    De0, De1 = P * D0, P * D1

    # Row tile over the packed row dimension (multiple of 8 = f32 sublane).
    Mp_raw = -(-M // P)
    TM = min(512, _round_up(max(Mp_raw, 1), 8))
    Mp = _round_up(Mp_raw, TM)
    M_pad = Mp * P

    # Pad rows (tail tile) so the hot loop is branch-free; padded rows dropped after.
    x0p = jnp.zeros((M_pad, D0), dtype).at[:M].set(x0).reshape(Mp, De0)
    x1p = jnp.zeros((M_pad, D1), dtype).at[:M].set(x1).reshape(Mp, De1)

    ws_bd = jax.scipy.linalg.block_diag(*([w_shift] * P)).astype(dtype)       # (De0, De1)
    wl_bd = jax.scipy.linalg.block_diag(*([w_log_scale] * P)).astype(dtype)   # (De0, De1)
    bs_p = jnp.tile(b_shift.reshape(1, D1).astype(dtype), (1, P))             # (1, De1)
    bl_p = jnp.tile(b_log_scale.reshape(1, D1).astype(dtype), (1, P))         # (1, De1)

    grid = (Mp // TM,)

    # VMEM budget: double-buffered x0/x1/y1/log_scale tiles + resident weights/biases,
    # with 2x headroom; clamped well below every generation's physical VMEM.
    tile_bytes = TM * (De0 + 3 * De1) * itemsize
    resident_bytes = (2 * De0 * De1 + 2 * De1) * itemsize
    vmem_limit = int(min(max(4 * (tile_bytes + resident_bytes), 16 << 20), 64 << 20))

    cost = pl.CostEstimate(
        flops=int(4 * Mp * De0 * De1 + 3 * Mp * De1),
        transcendentals=int(Mp * De1),
        bytes_accessed=int(itemsize * (Mp * (De0 + 3 * De1) + 2 * De0 * De1 + 2 * De1)),
    )

    y1p, lsp = pl.pallas_call(
        affine_coupling_kernel,
        out_shape=(
            jax.ShapeDtypeStruct((Mp, De1), dtype),
            jax.ShapeDtypeStruct((Mp, De1), dtype),
        ),
        grid=grid,
        in_specs=[
            pl.BlockSpec((TM, De0), lambda i: (i, 0)),    # x0 row tile (streamed)
            pl.BlockSpec((TM, De1), lambda i: (i, 0)),    # x1 row tile (streamed)
            pl.BlockSpec((De0, De1), lambda i: (0, 0)),   # W_shift (VMEM-resident)
            pl.BlockSpec((De0, De1), lambda i: (0, 0)),   # W_log_scale (VMEM-resident)
            pl.BlockSpec((1, De1), lambda i: (0, 0)),     # b_shift (resident)
            pl.BlockSpec((1, De1), lambda i: (0, 0)),     # b_log_scale (resident)
        ],
        out_specs=(
            pl.BlockSpec((TM, De1), lambda i: (i, 0)),    # y1 row tile
            pl.BlockSpec((TM, De1), lambda i: (i, 0)),    # log_scale row tile
        ),
        compiler_params=pltpu.CompilerParams(
            dimension_semantics=("parallel",),
            vmem_limit_bytes=vmem_limit,
        ),
        cost_estimate=cost,
    )(x0p, x1p, ws_bd, wl_bd, bs_p, bl_p)

    y1 = y1p.reshape(M_pad, D1)[:M]
    log_scale = lsp.reshape(M_pad, D1)[:M]
    y = jnp.concatenate([x0, y1], axis=1)
    return y, log_scale


if __name__ == "__main__":
    key = jax.random.PRNGKey(0)
    k_x, k_ws, k_wl, k_bs, k_bl = jax.random.split(key, 5)

    B, D = 16, 64
    mask = np.zeros(D, dtype=bool)
    mask[::2] = True                       # alternating coupling mask
    D0 = int(mask.sum())
    D1 = D - D0                            # 32 / 32

    x = jax.random.normal(k_x, (B, D), dtype=jnp.float32)
    w_shift = jax.random.normal(k_ws, (D0, D1), dtype=jnp.float32) / np.sqrt(D0)
    w_log_scale = jax.random.normal(k_wl, (D0, D1), dtype=jnp.float32) / np.sqrt(D0)
    b_shift = jax.random.normal(k_bs, (D1,), dtype=jnp.float32) * 0.1
    b_log_scale = jax.random.normal(k_bl, (D1,), dtype=jnp.float32) * 0.1

    y, log_scale = affine_coupling_forward(
        x, mask, w_shift, b_shift, w_log_scale, b_log_scale)
    y = jax.block_until_ready(y)
    log_scale = jax.block_until_ready(log_scale)

    # Plain-JAX reference mirroring AffineCoupling.forward with the same conditioner.
    idx0 = np.flatnonzero(mask)
    idx1 = np.flatnonzero(~mask)
    x0_ref = x[:, idx0]
    x1_ref = x[:, idx1]
    shift_ref = x0_ref @ w_shift + b_shift
    ls_ref = x0_ref @ w_log_scale + b_log_scale
    y1_ref = x1_ref * jnp.exp(ls_ref) + shift_ref
    y_ref = jnp.concatenate([x0_ref, y1_ref], axis=1)

    assert y.shape == (B, D) and log_scale.shape == (B, D1)
    assert jnp.allclose(y, y_ref, atol=1e-5, rtol=1e-5)
    assert jnp.allclose(log_scale, ls_ref, atol=1e-5, rtol=1e-5)

    print("KERNEL_OK")
</pallas_src>

<mosaic_0001>
module attributes {stable_mosaic.version = 11 : i64} {
  func.func @affine_coupling_kernel(%arg0: i32, %arg1: memref<8x128xf32, #tpu.memory_space<vmem>>, %arg2: memref<8x128xf32, #tpu.memory_space<vmem>>, %arg3: memref<128x128xf32, #tpu.memory_space<vmem>>, %arg4: memref<128x128xf32, #tpu.memory_space<vmem>>, %arg5: memref<1x128xf32, #tpu.memory_space<vmem>>, %arg6: memref<1x128xf32, #tpu.memory_space<vmem>>, %arg7: memref<8x128xf32, #tpu.memory_space<vmem>>, %arg8: memref<8x128xf32, #tpu.memory_space<vmem>>) attributes {dimension_semantics = [#tpu.dimension_semantics<parallel>], iteration_bounds = array<i64: 1>, scalar_prefetch = 0 : i64, scratch_operands = 0 : i64, tpu.core_type = #tpu.core_type<tc>, window_params = [{transform_indices = @transform_0, window_bounds = array<i64: 8, 128>}, {transform_indices = @transform_1, window_bounds = array<i64: 8, 128>}, {pipeline_mode = #tpu.pipeline_mode<synchronous>, transform_indices = @transform_2, window_bounds = array<i64: 128, 128>}, {pipeline_mode = #tpu.pipeline_mode<synchronous>, transform_indices = @transform_3, window_bounds = array<i64: 128, 128>}, {pipeline_mode = #tpu.pipeline_mode<synchronous>, transform_indices = @transform_4, window_bounds = array<i64: 1, 128>}, {pipeline_mode = #tpu.pipeline_mode<synchronous>, transform_indices = @transform_5, window_bounds = array<i64: 1, 128>}, {transform_indices = @transform_6, window_bounds = array<i64: 8, 128>}, {transform_indices = @transform_7, window_bounds = array<i64: 8, 128>}]} {
    %c0 = arith.constant 0 : index
    %c0_0 = arith.constant 0 : index
    %0 = vector.load %arg1[%c0, %c0_0] : memref<8x128xf32, #tpu.memory_space<vmem>>, vector<8x128xf32>
    %c0_1 = arith.constant 0 : index
    %c0_2 = arith.constant 0 : index
    %1 = vector.load %arg3[%c0_1, %c0_2] : memref<128x128xf32, #tpu.memory_space<vmem>>, vector<128x128xf32>
    %cst = arith.constant dense<0.000000e+00> : vector<8x128xf32>
    %2 = tpu.matmul %0, %1, %cst {dimension_numbers = #tpu.dot_dimension_numbers<[1], [0], [0], [1], [0, 0, 1, 1], [], []>} : vector<8x128xf32>, vector<128x128xf32>, vector<8x128xf32> -> vector<8x128xf32>
    %c0_3 = arith.constant 0 : index
    %c0_4 = arith.constant 0 : index
    %3 = vector.load %arg5[%c0_3, %c0_4] : memref<1x128xf32, #tpu.memory_space<vmem>>, vector<1x128xf32>
    %4 = vector.broadcast %3 : vector<1x128xf32> to vector<8x128xf32>
    %5 = arith.addf %2, %4 : vector<8x128xf32>
    %c0_5 = arith.constant 0 : index
    %c0_6 = arith.constant 0 : index
    %6 = vector.load %arg4[%c0_5, %c0_6] : memref<128x128xf32, #tpu.memory_space<vmem>>, vector<128x128xf32>
    %cst_7 = arith.constant dense<0.000000e+00> : vector<8x128xf32>
    %7 = tpu.matmul %0, %6, %cst_7 {dimension_numbers = #tpu.dot_dimension_numbers<[1], [0], [0], [1], [0, 0, 1, 1], [], []>} : vector<8x128xf32>, vector<128x128xf32>, vector<8x128xf32> -> vector<8x128xf32>
    %c0_8 = arith.constant 0 : index
    %c0_9 = arith.constant 0 : index
    %8 = vector.load %arg6[%c0_8, %c0_9] : memref<1x128xf32, #tpu.memory_space<vmem>>, vector<1x128xf32>
    %9 = vector.broadcast %8 : vector<1x128xf32> to vector<8x128xf32>
    %10 = arith.addf %7, %9 : vector<8x128xf32>
    %c0_10 = arith.constant 0 : index
    %c0_11 = arith.constant 0 : index
    %11 = vector.load %arg2[%c0_10, %c0_11] : memref<8x128xf32, #tpu.memory_space<vmem>>, vector<8x128xf32>
    %12 = math.exp %10 : vector<8x128xf32>
    %13 = arith.mulf %11, %12 : vector<8x128xf32>
    %14 = arith.addf %13, %5 : vector<8x128xf32>
    %c0_12 = arith.constant 0 : index
    %c0_13 = arith.constant 0 : index
    %15 = vector.load %arg7[%c0_12, %c0_13] : memref<8x128xf32, #tpu.memory_space<vmem>>, vector<8x128xf32>
    tpu.vector_store %arg7[%c0_12, %c0_13], %14 {strides = array<i32>} : memref<8x128xf32, #tpu.memory_space<vmem>>, vector<8x128xf32>,
    %c0_14 = arith.constant 0 : index
    %c0_15 = arith.constant 0 : index
    %16 = vector.load %arg8[%c0_14, %c0_15] : memref<8x128xf32, #tpu.memory_space<vmem>>, vector<8x128xf32>
    tpu.vector_store %arg8[%c0_14, %c0_15], %10 {strides = array<i32>} : memref<8x128xf32, #tpu.memory_space<vmem>>, vector<8x128xf32>,
    return
  }
  func.func @transform_0(%arg0: i32) -> (i32, i32) {
    %c0_i32 = arith.constant 0 : i32
    %c0_i32_0 = arith.constant 0 : i32
    return %arg0, %c0_i32 : i32, i32
  }
  func.func @transform_1(%arg0: i32) -> (i32, i32) {
    %c0_i32 = arith.constant 0 : i32
    %c0_i32_0 = arith.constant 0 : i32
    return %arg0, %c0_i32 : i32, i32
  }
  func.func @transform_2(%arg0: i32) -> (i32, i32) {
    %c0_i32 = arith.constant 0 : i32
    %c0_i32_0 = arith.constant 0 : i32
    %c0_i32_1 = arith.constant 0 : i32
    return %c0_i32, %c0_i32_0 : i32, i32
  }
  func.func @transform_3(%arg0: i32) -> (i32, i32) {
    %c0_i32 = arith.constant 0 : i32
    %c0_i32_0 = arith.constant 0 : i32
    %c0_i32_1 = arith.constant 0 : i32
    return %c0_i32, %c0_i32_0 : i32, i32
  }
  func.func @transform_4(%arg0: i32) -> (i32, i32) {
    %c0_i32 = arith.constant 0 : i32
    %c0_i32_0 = arith.constant 0 : i32
    %c0_i32_1 = arith.constant 0 : i32
    return %c0_i32, %c0_i32_0 : i32, i32
  }
  func.func @transform_5(%arg0: i32) -> (i32, i32) {
    %c0_i32 = arith.constant 0 : i32
    %c0_i32_0 = arith.constant 0 : i32
    %c0_i32_1 = arith.constant 0 : i32
    return %c0_i32, %c0_i32_0 : i32, i32
  }
  func.func @transform_6(%arg0: i32) -> (i32, i32) {
    %c0_i32 = arith.constant 0 : i32
    %c0_i32_0 = arith.constant 0 : i32
    return %arg0, %c0_i32 : i32, i32
  }
  func.func @transform_7(%arg0: i32) -> (i32, i32) {
    %c0_i32 = arith.constant 0 : i32
    %c0_i32_0 = arith.constant 0 : i32
    return %arg0, %c0_i32 : i32, i32
  }
}

</mosaic_0001>

<llo_original>
// kernel: tpu_custom_call.1
$region0: #{tpu_custom_call.1}
  #allocation0 [shape = 'u32[]', space=smem, size = 0x4, offset = 0x4, fixed_abs, tag = 'smem constant byte address 0x4 - core index']
  #allocation1 [shape = 'u32[144,128]{1,0:T(1,128)}', space=vmem, size = 0x12000, scoped, tag = 'internal scratch']
  %s0 = inlined_call_operand.hbm [shape: f32[8,128], index: 0, kind: input, shape index: {}]
  %s1 = inlined_call_operand.hbm [shape: f32[8,128], index: 1, kind: input, shape index: {}]
  %s2 = inlined_call_operand.hbm [shape: f32[128,128], index: 2, kind: input, shape index: {}]
  %s3 = inlined_call_operand.hbm [shape: f32[128,128], index: 3, kind: input, shape index: {}]
  %s4 = inlined_call_operand.vmem [shape: f32[1,128], index: 4, kind: input, shape index: {}]
  %s5 = inlined_call_operand.vmem [shape: f32[1,128], index: 5, kind: input, shape index: {}]
  %s6 = inlined_call_operand.hbm [shape: f32[8,128], index: 6, kind: output, shape index: {0}]
  %s7 = inlined_call_operand.hbm [shape: f32[8,128], index: 7, kind: output, shape index: {1}]
  %8 = xla_tuple %s6, %s7
  %s9 = sld [smem:[#allocation0]]
  $region58: #{tpu_custom_call.1} parent=0
    _
  %s11 = ssub.s32 1, %s9
  %s12 = scalar_select 0, %s11, %s9
  $region1: #{tpu_custom_call.1} parent=0
    #allocation2 [shape = 'u8[4096]{0}', space=vmem, size = 0x1000, scoped, tag = 'input window, operand 0, single buffered']
    #allocation3 [shape = 's32[1]{0}', space=sflag, size = 0x4, scoped, tag = 'scoped memory for tpu_custom_call.1']
    #allocation4 [shape = 's32[1]{0}', space=sflag, size = 0x4, scoped, tag = 'scoped memory for tpu_custom_call.1']
    #allocation5 [shape = 'u8[4096]{0}', space=vmem, size = 0x1000, scoped, tag = 'input window, operand 1, single buffered']
    #allocation6 [shape = 's32[1]{0}', space=sflag, size = 0x4, scoped, tag = 'scoped memory for tpu_custom_call.1']
    #allocation7 [shape = 'u8[65536]{0}', space=vmem, size = 0x10000, scoped, tag = 'input window, operand 2, single buffered']
    #allocation8 [shape = 'u8[65536]{0}', space=vmem, size = 0x10000, scoped, tag = 'input window, operand 3, single buffered']
    #allocation9 [shape = 's32[1]{0}', space=sflag, size = 0x4, scoped, tag = 'scoped memory for tpu_custom_call.1']
    #allocation10 [shape = 'u8[4096]{0}', space=vmem, size = 0x1000, scoped, tag = 'output window, operand 0, single buffered']
    #allocation11 [shape = 'u8[4096]{0}', space=vmem, size = 0x1000, scoped, tag = 'output window, operand 1, single buffered']
    #allocation12 [shape = 's32[1]{0}', space=sflag, size = 0x4, scoped, tag = 'scoped memory for tpu_custom_call.1']
    %13 = vsyncpa [#allocation3], 0
    %14 = vsyncpa [#allocation6], 0
    %15 = vsyncpa [#allocation9], 0
    %16 = vsyncpa [#allocation4], 0
    %17 = vsyncpa [#allocation12], 0
    // Predicated region
    $region2: #{tpu_custom_call.1} parent=1 // pred_check
      _
    $region3: #{tpu_custom_call.1} parent=1 // pred_check_branch
      %19 = sbr.rel (0) target = $region5
    $region4: #{tpu_custom_call.1} parent=1 // pred_region
      %s21 = ssub.s32 128, 128
      %22 = vsyncadd [#allocation3], %s21
      %s24 = sshll.u32 [#allocation2], 4
      %s25 = int_to_ptr.vmem [resolvable:$true] %s24
      %27 = dma.hbm_to_vmem [thread:$0]  %s0, 128, %s25, [#allocation3]
    $region5: #{tpu_custom_call.1} parent=1 // pred_fallthru
      _
    // Predicated region
    $region6: #{tpu_custom_call.1} parent=1 // pred_check
      _
    $region7: #{tpu_custom_call.1} parent=1 // pred_check_branch
      %29 = sbr.rel (0) target = $region9
    $region8: #{tpu_custom_call.1} parent=1 // pred_region
      %s31 = ssub.s32 128, 128
      %32 = vsyncadd [#allocation6], %s31
      %s34 = sshll.u32 [#allocation5], 4
      %s35 = int_to_ptr.vmem [resolvable:$true] %s34
      %37 = dma.hbm_to_vmem [thread:$0]  %s1, 128, %s35, [#allocation6]
    $region9: #{tpu_custom_call.1} parent=1 // pred_fallthru
      _
    // Predicated region
    $region10: #{tpu_custom_call.1} parent=1 // pred_check
      _
    $region11: #{tpu_custom_call.1} parent=1 // pred_check_branch
      %39 = sbr.rel (0) target = $region13
    $region12: #{tpu_custom_call.1} parent=1 // pred_region
      %s41 = ssub.s32 2048, 2048
      %42 = vsyncadd [#allocation6], %s41
      %s43 = sshll.u32 [#allocation7], 4
      %s44 = int_to_ptr.vmem [resolvable:$true] %s43
      %49 = dma.hbm_to_vmem [thread:$0]  %s2, 2048, %s44, [#allocation6], 128, 128, 8
    $region13: #{tpu_custom_call.1} parent=1 // pred_fallthru
      _
    // Predicated region
    $region14: #{tpu_custom_call.1} parent=1 // pred_check
      _
    $region15: #{tpu_custom_call.1} parent=1 // pred_check_branch
      %51 = sbr.rel (0) target = $region17
    $region16: #{tpu_custom_call.1} parent=1 // pred_region
      %s53 = ssub.s32 2048, 2048
      %54 = vsyncadd [#allocation9], %s53
      %s55 = sshll.u32 [#allocation8], 4
      %s56 = int_to_ptr.vmem [resolvable:$true] %s55
      %61 = dma.hbm_to_vmem [thread:$0]  %s3, 2048, %s56, [#allocation9], 128, 128, 8
    $region17: #{tpu_custom_call.1} parent=1 // pred_fallthru
      _
    // Predicated region
    $region18: #{tpu_custom_call.1} parent=1 // pred_check
      _
    $region19: #{tpu_custom_call.1} parent=1 // pred_check_branch
      %63 = sbr.rel (0) target = $region21
    $region20: #{tpu_custom_call.1} parent=1 // pred_region
      _
    $region21: #{tpu_custom_call.1} parent=1 // pred_fallthru
      _
    // Predicated region
    $region22: #{tpu_custom_call.1} parent=1 // pred_check
      _
    $region23: #{tpu_custom_call.1} parent=1 // pred_check_branch
      %65 = sbr.rel (0) target = $region25
    $region24: #{tpu_custom_call.1} parent=1 // pred_region
      _
    $region25: #{tpu_custom_call.1} parent=1 // pred_fallthru
      _
    // Predicated region
    $region26: #{tpu_custom_call.1} parent=1 // pred_check
      _
    $region27: #{tpu_custom_call.1} parent=1 // pred_check_branch
      %67 = sbr.rel (0) target = $region29
    $region28: #{tpu_custom_call.1} parent=1 // pred_region
      %68 = dma.done [#allocation3], 128
    $region29: #{tpu_custom_call.1} parent=1 // pred_fallthru
      _
    // Predicated region
    $region30: #{tpu_custom_call.1} parent=1 // pred_check
      _
    $region31: #{tpu_custom_call.1} parent=1 // pred_check_branch
      %70 = sbr.rel (0) target = $region33
    $region32: #{tpu_custom_call.1} parent=1 // pred_region
      %71 = dma.done [#allocation6], 128
    $region33: #{tpu_custom_call.1} parent=1 // pred_fallthru
      _
    // Predicated region
    $region34: #{tpu_custom_call.1} parent=1 // pred_check
      _
    $region35: #{tpu_custom_call.1} parent=1 // pred_check_branch
      %73 = sbr.rel (0) target = $region37
    $region36: #{tpu_custom_call.1} parent=1 // pred_region
      %74 = dma.done [#allocation6], 2048
    $region37: #{tpu_custom_call.1} parent=1 // pred_fallthru
      _
    // Predicated region
    $region38: #{tpu_custom_call.1} parent=1 // pred_check
      _
    $region39: #{tpu_custom_call.1} parent=1 // pred_check_branch
      %76 = sbr.rel (0) target = $region41
    $region40: #{tpu_custom_call.1} parent=1 // pred_region
      %77 = dma.done [#allocation9], 2048
    $region41: #{tpu_custom_call.1} parent=1 // pred_fallthru
      _
    %v78 = vld [vmem:[#allocation2] sm:$0xff]
    %v79 = vld [vmem:[#allocation7] sm:$0xff]
    %v80 = vld [vmem:[#allocation7 + $0x8] sm:$0xff]
    %v81 = vld [vmem:[#allocation7 + $0x10] sm:$0xff]
    %v82 = vld [vmem:[#allocation7 + $0x18] sm:$0xff]
    %v83 = vld [vmem:[#allocation7 + $0x20] sm:$0xff]
    %v84 = vld [vmem:[#allocation7 + $0x28] sm:$0xff]
    %v85 = vld [vmem:[#allocation7 + $0x30] sm:$0xff]
    %v86 = vld [vmem:[#allocation7 + $0x38] sm:$0xff]
    %v87 = vld [vmem:[#allocation7 + $0x40] sm:$0xff]
    %v88 = vld [vmem:[#allocation7 + $0x48] sm:$0xff]
    %v89 = vld [vmem:[#allocation7 + $0x50] sm:$0xff]
    %v90 = vld [vmem:[#allocation7 + $0x58] sm:$0xff]
    %v91 = vld [vmem:[#allocation7 + $0x60] sm:$0xff]
    %v92 = vld [vmem:[#allocation7 + $0x68] sm:$0xff]
    %v93 = vld [vmem:[#allocation7 + $0x70] sm:$0xff]
    %v94 = vld [vmem:[#allocation7 + $0x78] sm:$0xff]
    %v95 = vld [vmem:[%s4] sm:$0x1]
    %v97 = vlaneseq
    %v98 = vshrl.u32 %v97, 7
    %v99 = vsub.s32 0, %v98
    %v100 = vrot.slane %v95, %v99
    %102 = vmatprep.subr.mxu0 0.0
    %103 = vmatpush1.msra.mxu0 %v94
    %104 = vmatprep.subr.mxu0 0.0
    %105 = vmatpush1.msra.mxu0 %v93
    %106 = vmatprep.subr.mxu0 0.0
    %107 = vmatpush1.msra.mxu0 %v92
    %108 = vmatprep.subr.mxu0 0.0
    %109 = vmatpush1.msra.mxu0 %v91
    %110 = vmatprep.subr.mxu0 0.0
    %111 = vmatpush1.msra.mxu0 %v90
    %112 = vmatprep.subr.mxu0 0.0
    %113 = vmatpush1.msra.mxu0 %v89
    %114 = vmatprep.subr.mxu0 0.0
    %115 = vmatpush1.msra.mxu0 %v88
    %116 = vmatprep.subr.mxu0 0.0
    %117 = vmatpush1.msra.mxu0 %v87
    %118 = vmatprep.subr.mxu0 0.0
    %119 = vmatpush1.msra.mxu0 %v86
    %120 = vmatprep.subr.mxu0 0.0
    %121 = vmatpush1.msra.mxu0 %v85
    %122 = vmatprep.subr.mxu0 0.0
    %123 = vmatpush1.msra.mxu0 %v84
    %124 = vmatprep.subr.mxu0 0.0
    %125 = vmatpush1.msra.mxu0 %v83
    %126 = vmatprep.subr.mxu0 0.0
    %127 = vmatpush1.msra.mxu0 %v82
    %128 = vmatprep.subr.mxu0 0.0
    %129 = vmatpush1.msra.mxu0 %v81
    %130 = vmatprep.subr.mxu0 0.0
    %131 = vmatpush1.msra.mxu0 %v80
    %132 = vmatprep.subr.mxu0 0.0
    %133 = vmatpush1.msra.mxu0 %v79
    %134 = vmatprep.subr.mxu0 0.0
    %135 = vmatpush2.msra.mxu0 0.0
    %136 = vmatprep.subr.mxu0 0.0
    %137 = vmatpush2.msra.mxu0 0.0
    %138 = vmatprep.subr.mxu0 0.0
    %139 = vmatpush2.msra.mxu0 0.0
    %140 = vmatprep.subr.mxu0 0.0
    %141 = vmatpush2.msra.mxu0 0.0
    %142 = vmatprep.subr.mxu0 0.0
    %143 = vmatpush2.msra.mxu0 0.0
    %144 = vmatprep.subr.mxu0 0.0
    %145 = vmatpush2.msra.mxu0 0.0
    %146 = vmatprep.subr.mxu0 0.0
    %147 = vmatpush2.msra.mxu0 0.0
    %148 = vmatprep.subr.mxu0 0.0
    %149 = vmatpush2.msra.mxu0 0.0
    %150 = vmatprep.subr.mxu0 0.0
    %151 = vmatpush2.msra.mxu0 0.0
    %152 = vmatprep.subr.mxu0 0.0
    %153 = vmatpush2.msra.mxu0 0.0
    %154 = vmatprep.subr.mxu0 0.0
    %155 = vmatpush2.msra.mxu0 0.0
    %156 = vmatprep.subr.mxu0 0.0
    %157 = vmatpush2.msra.mxu0 0.0
    %158 = vmatprep.subr.mxu0 0.0
    %159 = vmatpush2.msra.mxu0 0.0
    %160 = vmatprep.subr.mxu0 0.0
    %161 = vmatpush2.msra.mxu0 0.0
    %162 = vmatprep.subr.mxu0 0.0
    %163 = vmatpush2.msra.mxu0 0.0
    %164 = vmatprep.subr.mxu0 0.0
    %165 = vmatpush2.msra.mxu0 0.0
    %166 = vmatprep.mubr.f32.mxu0 0.0
    %167 = vmatmul.mubr.f32.gmra.mxu0 %v78
    %v168 = vpop.f32.mrf.mxu0
    %v169 = vadd.f32 %v100, %v168
    %v170 = vpop.f32.mrf.mxu0
    %171 = vdwg.mxu0
    %v172 = vld [vmem:[#allocation8] sm:$0xff]
    %v173 = vld [vmem:[#allocation8 + $0x8] sm:$0xff]
    %v174 = vld [vmem:[#allocation8 + $0x10] sm:$0xff]
    %v175 = vld [vmem:[#allocation8 + $0x18] sm:$0xff]
    %v176 = vld [vmem:[#allocation8 + $0x20] sm:$0xff]
    %v177 = vld [vmem:[#allocation8 + $0x28] sm:$0xff]
    %v178 = vld [vmem:[#allocation8 + $0x30] sm:$0xff]
    %v179 = vld [vmem:[#allocation8 + $0x38] sm:$0xff]
    %v180 = vld [vmem:[#allocation8 + $0x40] sm:$0xff]
    %v181 = vld [vmem:[#allocation8 + $0x48] sm:$0xff]
    %v182 = vld [vmem:[#allocation8 + $0x50] sm:$0xff]
    %v183 = vld [vmem:[#allocation8 + $0x58] sm:$0xff]
    %v184 = vld [vmem:[#allocation8 + $0x60] sm:$0xff]
    %v185 = vld [vmem:[#allocation8 + $0x68] sm:$0xff]
    %v186 = vld [vmem:[#allocation8 + $0x70] sm:$0xff]
    %v187 = vld [vmem:[#allocation8 + $0x78] sm:$0xff]
    %v188 = vld [vmem:[%s5] sm:$0x1]
    %v190 = vlaneseq
    %v191 = vshrl.u32 %v190, 7
    %v192 = vsub.s32 0, %v191
    %v193 = vrot.slane %v188, %v192
    %195 = vmatprep.subr.mxu0 0.0
    %196 = vmatpush1.msra.mxu0 %v187
    %197 = vmatprep.subr.mxu0 0.0
    %198 = vmatpush1.msra.mxu0 %v186
    %199 = vmatprep.subr.mxu0 0.0
    %200 = vmatpush1.msra.mxu0 %v185
    %201 = vmatprep.subr.mxu0 0.0
    %202 = vmatpush1.msra.mxu0 %v184
    %203 = vmatprep.subr.mxu0 0.0
    %204 = vmatpush1.msra.mxu0 %v183
    %205 = vmatprep.subr.mxu0 0.0
    %206 = vmatpush1.msra.mxu0 %v182
    %207 = vmatprep.subr.mxu0 0.0
    %208 = vmatpush1.msra.mxu0 %v181
    %209 = vmatprep.subr.mxu0 0.0
    %210 = vmatpush1.msra.mxu0 %v180
    %211 = vmatprep.subr.mxu0 0.0
    %212 = vmatpush1.msra.mxu0 %v179
    %213 = vmatprep.subr.mxu0 0.0
    %214 = vmatpush1.msra.mxu0 %v178
    %215 = vmatprep.subr.mxu0 0.0
    %216 = vmatpush1.msra.mxu0 %v177
    %217 = vmatprep.subr.mxu0 0.0
    %218 = vmatpush1.msra.mxu0 %v176
    %219 = vmatprep.subr.mxu0 0.0
    %220 = vmatpush1.msra.mxu0 %v175
    %221 = vmatprep.subr.mxu0 0.0
    %222 = vmatpush1.msra.mxu0 %v174
    %223 = vmatprep.subr.mxu0 0.0
    %224 = vmatpush1.msra.mxu0 %v173
    %225 = vmatprep.subr.mxu0 0.0
    %226 = vmatpush1.msra.mxu0 %v172
    %227 = vmatprep.subr.mxu0 0.0
    %228 = vmatpush2.msra.mxu0 0.0
    %229 = vmatprep.subr.mxu0 0.0
    %230 = vmatpush2.msra.mxu0 0.0
    %231 = vmatprep.subr.mxu0 0.0
    %232 = vmatpush2.msra.mxu0 0.0
    %233 = vmatprep.subr.mxu0 0.0
    %234 = vmatpush2.msra.mxu0 0.0
    %235 = vmatprep.subr.mxu0 0.0
    %236 = vmatpush2.msra.mxu0 0.0
    %237 = vmatprep.subr.mxu0 0.0
    %238 = vmatpush2.msra.mxu0 0.0
    %239 = vmatprep.subr.mxu0 0.0
    %240 = vmatpush2.msra.mxu0 0.0
    %241 = vmatprep.subr.mxu0 0.0
    %242 = vmatpush2.msra.mxu0 0.0
    %243 = vmatprep.subr.mxu0 0.0
    %244 = vmatpush2.msra.mxu0 0.0
    %245 = vmatprep.subr.mxu0 0.0
    %246 = vmatpush2.msra.mxu0 0.0
    %247 = vmatprep.subr.mxu0 0.0
    %248 = vmatpush2.msra.mxu0 0.0
    %249 = vmatprep.subr.mxu0 0.0
    %250 = vmatpush2.msra.mxu0 0.0
    %251 = vmatprep.subr.mxu0 0.0
    %252 = vmatpush2.msra.mxu0 0.0
    %253 = vmatprep.subr.mxu0 0.0
    %254 = vmatpush2.msra.mxu0 0.0
    %255 = vmatprep.subr.mxu0 0.0
    %256 = vmatpush2.msra.mxu0 0.0
    %257 = vmatprep.subr.mxu0 0.0
    %258 = vmatpush2.msra.mxu0 0.0
    %259 = vmatprep.mubr.f32.mxu0 0.0
    %260 = vmatmul.mubr.f32.gmra.mxu0 %v78
    %v261 = vpop.f32.mrf.mxu0
    %v262 = vadd.f32 %v193, %v261
    %v263 = vpop.f32.mrf.mxu0
    %264 = vdwg.mxu0
    %v265 = vld [vmem:[#allocation5] sm:$0xff]
    %v266 = vmul.f32 %v262, 1.442695
    %v267 = vpow.pop %v266
    %v268 = vmul.f32 %v265, %v267
    %v269 = vadd.f32 %v268, %v169
    %270 = vst [vmem:[#allocation10] sm:$0xff] %v269
    %271 = vst [vmem:[#allocation11] sm:$0xff] %v262
    // Predicated region
    $region42: #{tpu_custom_call.1} parent=1 // pred_check
      _
    $region43: #{tpu_custom_call.1} parent=1 // pred_check_branch
      %273 = sbr.rel (0) target = $region45
    $region44: #{tpu_custom_call.1} parent=1 // pred_region
      %s275 = ssub.s32 128, 128
      %276 = vsyncadd [#allocation4], %s275
      %s278 = sshll.u32 [#allocation10], 4
      %s279 = int_to_ptr.vmem [resolvable:$true] %s278
      %281 = dma.vmem_to_hbm [thread:$0]  %s279, 128, %s6, [#allocation4]
    $region45: #{tpu_custom_call.1} parent=1 // pred_fallthru
      _
    // Predicated region
    $region46: #{tpu_custom_call.1} parent=1 // pred_check
      _
    $region47: #{tpu_custom_call.1} parent=1 // pred_check_branch
      %283 = sbr.rel (0) target = $region49
    $region48: #{tpu_custom_call.1} parent=1 // pred_region
      %s285 = ssub.s32 128, 128
      %286 = vsyncadd [#allocation12], %s285
      %s288 = sshll.u32 [#allocation11], 4
      %s289 = int_to_ptr.vmem [resolvable:$true] %s288
      %291 = dma.vmem_to_hbm [thread:$0]  %s289, 128, %s7, [#allocation12]
    $region49: #{tpu_custom_call.1} parent=1 // pred_fallthru
      _
    // Predicated region
    $region50: #{tpu_custom_call.1} parent=1 // pred_check
      _
    $region51: #{tpu_custom_call.1} parent=1 // pred_check_branch
      %293 = sbr.rel (0) target = $region53
    $region52: #{tpu_custom_call.1} parent=1 // pred_region
      %294 = dma.done [#allocation4], 128
    $region53: #{tpu_custom_call.1} parent=1 // pred_fallthru
      _
    // Predicated region
    $region54: #{tpu_custom_call.1} parent=1 // pred_check
      _
    $region55: #{tpu_custom_call.1} parent=1 // pred_check_branch
      %296 = sbr.rel (0) target = $region57
    $region56: #{tpu_custom_call.1} parent=1 // pred_region
      %297 = dma.done [#allocation12], 128
    $region57: #{tpu_custom_call.1} parent=1 // pred_fallthru
      _
    %298 = vsyncpa [#allocation3], 1
    %299 = vsyncpa [#allocation6], 1
    %300 = vsyncpa [#allocation9], 1
    %301 = vsyncpa [#allocation4], 1
    %302 = vsyncpa [#allocation12], 1

</llo_original>
